<compile_context>
chip_gen: v5e
topology: v5e:2x2
jax: 0.10.0
libtpu: 0.0.40
codegen_flags: <defaults>
</compile_context>

<pallas_src>
import functools

import jax
import jax.numpy as jnp
from jax.experimental import pallas as pl
from jax.experimental.pallas import tpu as pltpu


def _disc_kernel(layer_num, *refs):
    # refs: f_ref, [w_fc_i (bf16), b_fc_i (f32)] * layer_num,
    #       w_head (f32), b_head (f32), out_ref
    f_ref = refs[0]
    fc = refs[1:1 + 2 * layer_num]
    w_head_ref = refs[1 + 2 * layer_num]
    b_head_ref = refs[2 + 2 * layer_num]
    out_ref = refs[-1]

    bt, n, c0 = f_ref.shape
    # flatten (Bt, N, C) -> (Bt*N, C): one big MXU pass per layer
    x = f_ref[...].reshape(bt * n, c0)

    # pointwise-conv (k=1 Conv1d) stack + LeakyReLU(0.2)
    for i in range(layer_num):
        w = fc[2 * i][...]            # (C_in, C_out) bf16
        b = fc[2 * i + 1][...]        # (1, C_out)    f32
        x = jnp.dot(x, w, preferred_element_type=jnp.float32) + b
        x = jnp.maximum(x, 0.2 * x)   # LeakyReLU in f32
        if i + 1 < layer_num:
            x = x.astype(w.dtype)     # back to bf16 for the next MXU pass

    # max_pool1d over the full vertex axis -> (Bt, F_last)
    pooled = jnp.max(x.reshape(bt, n, x.shape[-1]), axis=1)

    # 4 activation-free Linear layers pre-composed into one (F_last, 1) linear
    res = jnp.dot(pooled, w_head_ref[...], preferred_element_type=jnp.float32)
    res = res + b_head_ref[...]
    out_ref[...] = res.astype(out_ref.dtype)


def make_params(key, features):
    """Deterministic parameter init matching the shapes in __init__."""
    def linear(k, fan_in, fan_out):
        kw, kb = jax.random.split(k)
        s = 1.0 / jnp.sqrt(jnp.float32(fan_in))
        w = jax.random.uniform(kw, (fan_in, fan_out), jnp.float32, -s, s)
        b = jax.random.uniform(kb, (1, fan_out), jnp.float32, -s, s)
        return w, b

    layer_num = len(features) - 1
    keys = jax.random.split(key, layer_num + 4)
    params = {
        "fc": [linear(keys[i], features[i], features[i + 1])
               for i in range(layer_num)],
    }
    head_dims = [(features[-1], features[-1]),
                 (features[-1], features[-2]),
                 (features[-2], features[-2]),
                 (features[-2], 1)]
    params["final"] = [linear(keys[layer_num + i], a, b)
                       for i, (a, b) in enumerate(head_dims)]
    return params


def discriminator(f, params, *, bt=8, compute_dtype=jnp.bfloat16):
    """f: (B, N, features[0]) float32 -> (B, 1) float32."""
    B, N, C0 = f.shape
    layer_num = len(params["fc"])

    # --- batch tiling: pack Bt batch elements per grid step -----------------
    if B <= bt:
        Bt, B_pad = B, B
    else:
        assert bt % 8 == 0, "batch tile must be a multiple of 8 when tiled"
        Bt = bt
        B_pad = ((B + Bt - 1) // Bt) * Bt
    if B_pad != B:
        f = jnp.concatenate(
            [f, jnp.zeros((B_pad - B, N, C0), f.dtype)], axis=0)
    G = B_pad // Bt

    # --- operand preparation (wrapper-side) ---------------------------------
    # bf16 input + conv weights (half the DMA bytes, bf16-native MXU);
    # biases stay f32 so accumulation/activation math is f32.
    f_in = f.astype(compute_dtype)
    flat = []
    for w, b in params["fc"]:
        flat += [w.astype(compute_dtype), b.astype(jnp.float32)]

    # pre-compose the 4 activation-free final Linears: h@W1+b1 ... @W4+b4
    #   == h @ (W1@W2@W3@W4) + (((b1@W2+b2)@W3+b3)@W4+b4)
    w_head, b_head = params["final"][0]
    for w, b in params["final"][1:]:
        b_head = b_head @ w + b
        w_head = w_head @ w
    flat += [w_head.astype(jnp.float32), b_head.astype(jnp.float32)]

    in_specs = [pl.BlockSpec((Bt, N, C0), lambda g: (g, 0, 0))]
    for p in flat:
        in_specs.append(pl.BlockSpec(p.shape, lambda g: (0, 0)))

    out = pl.pallas_call(
        functools.partial(_disc_kernel, layer_num),
        out_shape=jax.ShapeDtypeStruct((B_pad, 1), jnp.float32),
        grid=(G,),
        in_specs=in_specs,
        out_specs=pl.BlockSpec((Bt, 1), lambda g: (g, 0)),
        compiler_params=pltpu.CompilerParams(
            dimension_semantics=("parallel",)),
    )(f_in, *flat)
    return out[:B]


def reference(f, params, compute_dtype=jnp.bfloat16):
    """Pure-JAX mirror of Discriminator.forward (k=1 Conv1d == per-vertex
    matmul), using the same mixed-precision operand rounding as the kernel but
    keeping the 4 final Linear layers separate like the PyTorch module."""
    layer_num = len(params["fc"])
    x = f.astype(compute_dtype)
    for i, (w, b) in enumerate(params["fc"]):
        x = jnp.dot(x, w.astype(compute_dtype),
                    preferred_element_type=jnp.float32) + b
        x = jnp.maximum(x, 0.2 * x)                 # LeakyReLU(0.2)
        if i + 1 < layer_num:
            x = x.astype(compute_dtype)
    h = jnp.max(x, axis=1)                          # max_pool1d over vertices
    for w, b in params["final"]:                    # 4 separate Linears
        h = h @ w + b
    return h


if __name__ == "__main__":
    features = [16, 32, 64]
    B, N = 2, 16

    key = jax.random.PRNGKey(0)
    kf, kp = jax.random.split(key)
    f = jax.random.normal(kf, (B, N, features[0]), jnp.float32)
    params = make_params(kp, features)

    out = discriminator(f, params)
    out = jax.block_until_ready(out)

    ref = reference(f, params)
    assert out.shape == (B, 1), out.shape
    assert jnp.allclose(out, ref, atol=1e-3, rtol=1e-3), (out, ref)
    print("KERNEL_OK")
</pallas_src>

<mosaic_0001>
module attributes {stable_mosaic.version = 11 : i64} {
  func.func @_disc_kernel(%arg0: i32, %arg1: memref<2x16x16xbf16, #tpu.memory_space<vmem>>, %arg2: memref<16x32xbf16, #tpu.memory_space<vmem>>, %arg3: memref<1x32xf32, #tpu.memory_space<vmem>>, %arg4: memref<32x64xbf16, #tpu.memory_space<vmem>>, %arg5: memref<1x64xf32, #tpu.memory_space<vmem>>, %arg6: memref<64x1xf32, #tpu.memory_space<vmem>>, %arg7: memref<1x1xf32, #tpu.memory_space<vmem>>, %arg8: memref<2x1xf32, #tpu.memory_space<vmem>>) attributes {dimension_semantics = [#tpu.dimension_semantics<parallel>], iteration_bounds = array<i64: 1>, scalar_prefetch = 0 : i64, scratch_operands = 0 : i64, tpu.core_type = #tpu.core_type<tc>, window_params = [{transform_indices = @transform_0, window_bounds = array<i64: 2, 16, 16>}, {pipeline_mode = #tpu.pipeline_mode<synchronous>, transform_indices = @transform_1, window_bounds = array<i64: 16, 32>}, {pipeline_mode = #tpu.pipeline_mode<synchronous>, transform_indices = @transform_2, window_bounds = array<i64: 1, 32>}, {pipeline_mode = #tpu.pipeline_mode<synchronous>, transform_indices = @transform_3, window_bounds = array<i64: 32, 64>}, {pipeline_mode = #tpu.pipeline_mode<synchronous>, transform_indices = @transform_4, window_bounds = array<i64: 1, 64>}, {pipeline_mode = #tpu.pipeline_mode<synchronous>, transform_indices = @transform_5, window_bounds = array<i64: 64, 1>}, {pipeline_mode = #tpu.pipeline_mode<synchronous>, transform_indices = @transform_6, window_bounds = array<i64: 1, 1>}, {transform_indices = @transform_7, window_bounds = array<i64: 2, 1>}]} {
    %c0 = arith.constant 0 : index
    %c0_0 = arith.constant 0 : index
    %c0_1 = arith.constant 0 : index
    %0 = vector.load %arg1[%c0, %c0_0, %c0_1] : memref<2x16x16xbf16, #tpu.memory_space<vmem>>, vector<2x16x16xbf16>
    %1 = vector.shape_cast %0 : vector<2x16x16xbf16> to vector<32x16xbf16>
    %c0_2 = arith.constant 0 : index
    %c0_3 = arith.constant 0 : index
    %2 = vector.load %arg2[%c0_2, %c0_3] : memref<16x32xbf16, #tpu.memory_space<vmem>>, vector<16x32xbf16>
    %c0_4 = arith.constant 0 : index
    %c0_5 = arith.constant 0 : index
    %3 = vector.load %arg3[%c0_4, %c0_5] : memref<1x32xf32, #tpu.memory_space<vmem>>, vector<1x32xf32>
    %cst = arith.constant dense<0.000000e+00> : vector<32x32xf32>
    %4 = tpu.matmul %1, %2, %cst {dimension_numbers = #tpu.dot_dimension_numbers<[1], [0], [0], [1], [0, 0, 1, 1], [], []>} : vector<32x16xbf16>, vector<16x32xbf16>, vector<32x32xf32> -> vector<32x32xf32>
    %5 = vector.broadcast %3 : vector<1x32xf32> to vector<32x32xf32>
    %6 = arith.addf %4, %5 : vector<32x32xf32>
    %cst_6 = arith.constant 2.000000e-01 : f32
    %7 = vector.broadcast %cst_6 : f32 to vector<32x32xf32>
    %8 = arith.mulf %7, %6 : vector<32x32xf32>
    %9 = arith.maximumf %6, %8 : vector<32x32xf32>
    %10 = arith.truncf %9 : vector<32x32xf32> to vector<32x32xbf16>
    %c0_7 = arith.constant 0 : index
    %c0_8 = arith.constant 0 : index
    %11 = vector.load %arg4[%c0_7, %c0_8] : memref<32x64xbf16, #tpu.memory_space<vmem>>, vector<32x64xbf16>
    %c0_9 = arith.constant 0 : index
    %c0_10 = arith.constant 0 : index
    %12 = vector.load %arg5[%c0_9, %c0_10] : memref<1x64xf32, #tpu.memory_space<vmem>>, vector<1x64xf32>
    %cst_11 = arith.constant dense<0.000000e+00> : vector<32x64xf32>
    %13 = tpu.matmul %10, %11, %cst_11 {dimension_numbers = #tpu.dot_dimension_numbers<[1], [0], [0], [1], [0, 0, 1, 1], [], []>} : vector<32x32xbf16>, vector<32x64xbf16>, vector<32x64xf32> -> vector<32x64xf32>
    %14 = vector.broadcast %12 : vector<1x64xf32> to vector<32x64xf32>
    %15 = arith.addf %13, %14 : vector<32x64xf32>
    %cst_12 = arith.constant 2.000000e-01 : f32
    %16 = vector.broadcast %cst_12 : f32 to vector<32x64xf32>
    %17 = arith.mulf %16, %15 : vector<32x64xf32>
    %18 = arith.maximumf %15, %17 : vector<32x64xf32>
    %19 = vector.shape_cast %18 : vector<32x64xf32> to vector<2x16x64xf32>
    %cst_13 = arith.constant dense<0xFF800000> : vector<2x64xf32>
    %20 = vector.multi_reduction <maximumf>, %19, %cst_13 [1] : vector<2x16x64xf32> to vector<2x64xf32>
    %c0_14 = arith.constant 0 : index
    %c0_15 = arith.constant 0 : index
    %21 = vector.load %arg6[%c0_14, %c0_15] : memref<64x1xf32, #tpu.memory_space<vmem>>, vector<64x1xf32>
    %cst_16 = arith.constant dense<0.000000e+00> : vector<2x1xf32>
    %22 = tpu.matmul %20, %21, %cst_16 {dimension_numbers = #tpu.dot_dimension_numbers<[1], [0], [0], [1], [0, 0, 1, 1], [], []>} : vector<2x64xf32>, vector<64x1xf32>, vector<2x1xf32> -> vector<2x1xf32>
    %c0_17 = arith.constant 0 : index
    %c0_18 = arith.constant 0 : index
    %23 = vector.load %arg7[%c0_17, %c0_18] : memref<1x1xf32, #tpu.memory_space<vmem>>, vector<1x1xf32>
    %24 = vector.broadcast %23 : vector<1x1xf32> to vector<2x1xf32>
    %25 = arith.addf %22, %24 : vector<2x1xf32>
    %c0_19 = arith.constant 0 : index
    %c0_20 = arith.constant 0 : index
    %26 = vector.load %arg8[%c0_19, %c0_20] : memref<2x1xf32, #tpu.memory_space<vmem>>, vector<2x1xf32>
    tpu.vector_store %arg8[%c0_19, %c0_20], %25 {strides = array<i32>} : memref<2x1xf32, #tpu.memory_space<vmem>>, vector<2x1xf32>,
    return
  }
  func.func @transform_0(%arg0: i32) -> (i32, i32, i32) {
    %c0_i32 = arith.constant 0 : i32
    %c0_i32_0 = arith.constant 0 : i32
    %c0_i32_1 = arith.constant 0 : i32
    return %arg0, %c0_i32, %c0_i32_0 : i32, i32, i32
  }
  func.func @transform_1(%arg0: i32) -> (i32, i32) {
    %c0_i32 = arith.constant 0 : i32
    %c0_i32_0 = arith.constant 0 : i32
    %c0_i32_1 = arith.constant 0 : i32
    return %c0_i32, %c0_i32_0 : i32, i32
  }
  func.func @transform_2(%arg0: i32) -> (i32, i32) {
    %c0_i32 = arith.constant 0 : i32
    %c0_i32_0 = arith.constant 0 : i32
    %c0_i32_1 = arith.constant 0 : i32
    return %c0_i32, %c0_i32_0 : i32, i32
  }
  func.func @transform_3(%arg0: i32) -> (i32, i32) {
    %c0_i32 = arith.constant 0 : i32
    %c0_i32_0 = arith.constant 0 : i32
    %c0_i32_1 = arith.constant 0 : i32
    return %c0_i32, %c0_i32_0 : i32, i32
  }
  func.func @transform_4(%arg0: i32) -> (i32, i32) {
    %c0_i32 = arith.constant 0 : i32
    %c0_i32_0 = arith.constant 0 : i32
    %c0_i32_1 = arith.constant 0 : i32
    return %c0_i32, %c0_i32_0 : i32, i32
  }
  func.func @transform_5(%arg0: i32) -> (i32, i32) {
    %c0_i32 = arith.constant 0 : i32
    %c0_i32_0 = arith.constant 0 : i32
    %c0_i32_1 = arith.constant 0 : i32
    return %c0_i32, %c0_i32_0 : i32, i32
  }
  func.func @transform_6(%arg0: i32) -> (i32, i32) {
    %c0_i32 = arith.constant 0 : i32
    %c0_i32_0 = arith.constant 0 : i32
    %c0_i32_1 = arith.constant 0 : i32
    return %c0_i32, %c0_i32_0 : i32, i32
  }
  func.func @transform_7(%arg0: i32) -> (i32, i32) {
    %c0_i32 = arith.constant 0 : i32
    %c0_i32_0 = arith.constant 0 : i32
    return %arg0, %c0_i32 : i32, i32
  }
}

</mosaic_0001>

<llo_original>
// kernel: tpu_custom_call.1
$region0: #{tpu_custom_call.1}
  #allocation0 [shape = 'u32[]', space=smem, size = 0x4, offset = 0x4, fixed_abs, tag = 'smem constant byte address 0x4 - core index']
  #allocation1 [shape = 'u32[72,128]{1,0:T(1,128)}', space=vmem, size = 0x9000, scoped, tag = 'internal scratch']
  #allocation2 [shape = 'f32[1,1]{1,0:T(1,128)S(1)}', space=vmem, size = 0x200, scoped, tag = 'scoped memory for tpu_custom_call.1']
  %s0 = inlined_call_operand.vmem [shape: bf16[2,16,16], index: 0, kind: input, shape index: {}]
  %s1 = inlined_call_operand.vmem [shape: bf16[16,32], index: 1, kind: input, shape index: {}]
  %s2 = inlined_call_operand.vmem [shape: f32[1,32], index: 2, kind: input, shape index: {}]
  %s3 = inlined_call_operand.vmem [shape: bf16[32,64], index: 3, kind: input, shape index: {}]
  %s4 = inlined_call_operand.vmem [shape: f32[1,64], index: 4, kind: input, shape index: {}]
  %s5 = inlined_call_operand.vmem [shape: f32[64,1], index: 5, kind: input, shape index: {}]
  %s6 = inlined_call_operand.<no memory space> [shape: f32[1,1], index: 6, kind: input, shape index: {}]
  %s7 = inlined_call_operand.vmem [shape: f32[2,1], index: 7, kind: output, shape index: {}]
  %s8 = sld [smem:[#allocation0]]
  $region38: #{tpu_custom_call.1} parent=0
    _
  %s10 = ssub.s32 1, %s8
  %s11 = scalar_select 0, %s10, %s8
  %v12 = vstv %s6
  %13 = vst [vmem:[#allocation2] sm:$0x1] %v12
  // Predicated region
  $region2: #{tpu_custom_call.1} parent=0 // pred_check
    _
  $region3: #{tpu_custom_call.1} parent=0 // pred_check_branch
    %15 = sbr.rel (0) target = $region5
  $region4: #{tpu_custom_call.1} parent=0 // pred_region
    _
  $region5: #{tpu_custom_call.1} parent=0 // pred_fallthru
    _
  // Predicated region
  $region6: #{tpu_custom_call.1} parent=0 // pred_check
    _
  $region7: #{tpu_custom_call.1} parent=0 // pred_check_branch
    %17 = sbr.rel (0) target = $region9
  $region8: #{tpu_custom_call.1} parent=0 // pred_region
    _
  $region9: #{tpu_custom_call.1} parent=0 // pred_fallthru
    _
  // Predicated region
  $region10: #{tpu_custom_call.1} parent=0 // pred_check
    _
  $region11: #{tpu_custom_call.1} parent=0 // pred_check_branch
    %19 = sbr.rel (0) target = $region13
  $region12: #{tpu_custom_call.1} parent=0 // pred_region
    _
  $region13: #{tpu_custom_call.1} parent=0 // pred_fallthru
    _
  // Predicated region
  $region14: #{tpu_custom_call.1} parent=0 // pred_check
    _
  $region15: #{tpu_custom_call.1} parent=0 // pred_check_branch
    %21 = sbr.rel (0) target = $region17
  $region16: #{tpu_custom_call.1} parent=0 // pred_region
    _
  $region17: #{tpu_custom_call.1} parent=0 // pred_fallthru
    _
  // Predicated region
  $region18: #{tpu_custom_call.1} parent=0 // pred_check
    _
  $region19: #{tpu_custom_call.1} parent=0 // pred_check_branch
    %23 = sbr.rel (0) target = $region21
  $region20: #{tpu_custom_call.1} parent=0 // pred_region
    _
  $region21: #{tpu_custom_call.1} parent=0 // pred_fallthru
    _
  // Predicated region
  $region22: #{tpu_custom_call.1} parent=0 // pred_check
    _
  $region23: #{tpu_custom_call.1} parent=0 // pred_check_branch
    %25 = sbr.rel (0) target = $region25
  $region24: #{tpu_custom_call.1} parent=0 // pred_region
    _
  $region25: #{tpu_custom_call.1} parent=0 // pred_fallthru
    _
  // Predicated region
  $region26: #{tpu_custom_call.1} parent=0 // pred_check
    _
  $region27: #{tpu_custom_call.1} parent=0 // pred_check_branch
    %27 = sbr.rel (0) target = $region29
  $region28: #{tpu_custom_call.1} parent=0 // pred_region
    _
  $region29: #{tpu_custom_call.1} parent=0 // pred_fallthru
    _
  %v29 = vld [vmem:[%s0] sm:$0xf]
  %v30 = vld [vmem:[%s0 + $0x4] sm:$0xf]
  %v31 = vld [vmem:[%s0 + $0x8] sm:$0xf]
  %v32 = vld [vmem:[%s0 + $0xc] sm:$0xf]
  %v33 = vld [vmem:[%s1] sm:$0xf]
  %v34 = vld [vmem:[%s1 + $0x4] sm:$0xf]
  %v35 = vld [vmem:[%s2] sm:$0x1]
  %v37 = vperm.slane %v35, 0
  %v43 = vunpack.c.l.b16 %v29
  %v44 = vunpack.c.l.b16 %v30
  %v45 = vunpack.c.l.b16 %v31
  %v46 = vunpack.c.l.b16 %v32
  %v47 = vpack.c.b16 %v44, %v43
  %v48 = vpack.c.b16 %v46, %v45
  %v51 = vunpack.c.l.b16 %v33
  %v52 = vunpack.c.l.b16 %v34
  %v53 = vpack.c.b16 %v52, %v51
  %vm55 = vcmask 130048
  %v57 = vsel %vm55, %v47, 0
  %v60 = vsel %vm55, %v48, 0
  %62 = vmatpush.bf16.msra.mxu0 0
  %63 = vmatpush.bf16.msra.mxu0 0
  %64 = vmatpush.bf16.msra.mxu0 0
  %65 = vmatpush.bf16.msra.mxu0 0
  %66 = vmatpush.bf16.msra.mxu0 0
  %67 = vmatpush.bf16.msra.mxu0 0
  %68 = vmatpush.bf16.msra.mxu0 0
  %69 = vmatpush.bf16.msra.mxu0 %v53
  %70 = vmatmul.bf16.gmra.mxu0 %v57
  %v71 = vpop.f32.mrf.mxu0
  %v72 = vadd.f32 %v37, %v71
  %v73 = vpop.f32.mrf.mxu0
  %v74 = vadd.f32 %v37, %v73
  %75 = vmatmul.bf16.gmra.mxu0 %v60
  %v76 = vpop.f32.mrf.mxu0
  %v77 = vadd.f32 %v37, %v76
  %v78 = vpop.f32.mrf.mxu0
  %v79 = vadd.f32 %v37, %v78
  %80 = vdwg.mxu0
  %v81 = vmul.f32 %v72, 0.2
  %v82 = vmul.f32 %v74, 0.2
  %v83 = vmul.f32 %v77, 0.2
  %v84 = vmul.f32 %v79, 0.2
  %v85 = vmax.f32 %v72, %v81
  %v86 = vmax.f32 %v74, %v82
  %v87 = vmax.f32 %v77, %v83
  %v88 = vmax.f32 %v79, %v84
  %v89 = vpack.c.bf16 %v86, %v85
  %v90 = vpack.c.bf16 %v88, %v87
  %v91 = vld [vmem:[%s3] sm:$0xf]
  %v92 = vld [vmem:[%s3 + $0x4] sm:$0xf]
  %v93 = vld [vmem:[%s3 + $0x8] sm:$0xf]
  %v94 = vld [vmem:[%s3 + $0xc] sm:$0xf]
  %v95 = vld [vmem:[%s4] sm:$0x1]
  %v97 = vperm.slane %v95, 0
  %v103 = vunpack.c.l.b16 %v91
  %v104 = vunpack.c.l.b16 %v92
  %v105 = vunpack.c.l.b16 %v93
  %v106 = vunpack.c.l.b16 %v94
  %v107 = vpack.c.b16 %v104, %v103
  %v108 = vpack.c.b16 %v106, %v105
  %vm111 = vcmask 261120
  %v113 = vsel %vm111, %v89, 0
  %v116 = vsel %vm111, %v90, 0
  %118 = vmatpush.bf16.msra.mxu0 0
  %119 = vmatpush.bf16.msra.mxu0 0
  %120 = vmatpush.bf16.msra.mxu0 0
  %121 = vmatpush.bf16.msra.mxu0 0
  %122 = vmatpush.bf16.msra.mxu0 0
  %123 = vmatpush.bf16.msra.mxu0 0
  %124 = vmatpush.bf16.msra.mxu0 %v108
  %125 = vmatpush.bf16.msra.mxu0 %v107
  %126 = vmatmul.bf16.gmra.mxu0 %v113
  %v127 = vpop.f32.mrf.mxu0
  %v128 = vadd.f32 %v97, %v127
  %v129 = vpop.f32.mrf.mxu0
  %v130 = vadd.f32 %v97, %v129
  %131 = vmatmul.bf16.gmra.mxu0 %v116
  %v132 = vpop.f32.mrf.mxu0
  %v133 = vadd.f32 %v97, %v132
  %v134 = vpop.f32.mrf.mxu0
  %v135 = vadd.f32 %v97, %v134
  %136 = vdwg.mxu0
  %v137 = vmul.f32 %v128, 0.2
  %v138 = vmul.f32 %v130, 0.2
  %v139 = vmul.f32 %v133, 0.2
  %v140 = vmul.f32 %v135, 0.2
  %v141 = vmax.f32 %v128, %v137
  %v142 = vmax.f32 %v130, %v138
  %v143 = vmax.f32 %v133, %v139
  %v144 = vmax.f32 %v135, %v140
  %vm145 = vcmask 523264
  %v146 = vsel %vm145, %v141, -inf
  %v147 = vsel %vm145, %v142, -inf
  %v148 = vmax.f32 %v146, %v147
  %v149 = vrot.slane %v148, 4
  %v150 = vmax.f32 %v148, %v149
  %v151 = vrot.slane %v150, 2
  %v152 = vmax.f32 %v150, %v151
  %v153 = vrot.slane %v152, 1
  %v154 = vmax.f32 %v152, %v153
  %v155 = vsel %vm145, %v143, -inf
  %v156 = vsel %vm145, %v144, -inf
  %v157 = vmax.f32 %v155, %v156
  %v158 = vrot.slane %v157, 4
  %v159 = vmax.f32 %v157, %v158
  %v160 = vrot.slane %v159, 2
  %v161 = vmax.f32 %v159, %v160
  %v162 = vrot.slane %v161, 1
  %v163 = vmax.f32 %v161, %v162
  %v164 = vld [vmem:[%s5] sm:$0xff]
  %v165 = vld [vmem:[%s5 + $0x8] sm:$0xff]
  %v166 = vld [vmem:[%s5 + $0x10] sm:$0xff]
  %v167 = vld [vmem:[%s5 + $0x18] sm:$0xff]
  %v168 = vld [vmem:[%s5 + $0x20] sm:$0xff]
  %v169 = vld [vmem:[%s5 + $0x28] sm:$0xff]
  %v170 = vld [vmem:[%s5 + $0x30] sm:$0xff]
  %v171 = vld [vmem:[%s5 + $0x38] sm:$0xff]
  %v172 = vld [vmem:[#allocation2] sm:$0x1]
  %v174 = vperm.slane %v172, 0
  %vm178 = vcmask 1041409
  %v179 = vsel %vm178, %v163, %v154
  %v180 = vsel %vm145, %v179, 0
  %182 = vmatpush.msra.mxu0 0.0
  %183 = vmatpush.msra.mxu0 0.0
  %184 = vmatpush.msra.mxu0 0.0
  %185 = vmatpush.msra.mxu0 0.0
  %186 = vmatpush.msra.mxu0 0.0
  %187 = vmatpush.msra.mxu0 0.0
  %188 = vmatpush.msra.mxu0 0.0
  %189 = vmatpush.msra.mxu0 0.0
  %190 = vmatpush.msra.mxu0 %v171
  %191 = vmatpush.msra.mxu0 %v170
  %192 = vmatpush.msra.mxu0 %v169
  %193 = vmatpush.msra.mxu0 %v168
  %194 = vmatpush.msra.mxu0 %v167
  %195 = vmatpush.msra.mxu0 %v166
  %196 = vmatpush.msra.mxu0 %v165
  %197 = vmatpush.msra.mxu0 %v164
  %198 = vmatmul.f32.gmra.mxu0 %v180
  %v199 = vpop.f32.mrf.mxu0
  %v200 = vadd.f32 %v174, %v199
  %201 = vdwg.mxu0
  %vm202 = vcmask 1024
  %203 = vst.msk [vmem:[%s7] sm:$0x3] %vm202, %v200
  // Predicated region
  $region30: #{tpu_custom_call.1} parent=0 // pred_check
    _
  $region31: #{tpu_custom_call.1} parent=0 // pred_check_branch
    %205 = sbr.rel (0) target = $region33
  $region32: #{tpu_custom_call.1} parent=0 // pred_region
    _
  $region33: #{tpu_custom_call.1} parent=0 // pred_fallthru
    _
  // Predicated region
  $region34: #{tpu_custom_call.1} parent=0 // pred_check
    _
  $region35: #{tpu_custom_call.1} parent=0 // pred_check_branch
    %207 = sbr.rel (0) target = $region37
  $region36: #{tpu_custom_call.1} parent=0 // pred_region
    _
  $region37: #{tpu_custom_call.1} parent=0 // pred_fallthru
    _

</llo_original>
